<compile_context>
chip_gen: v6e
topology: v6e:2x2x1
jax: 0.10.0
libtpu: 0.0.40
codegen_flags: <defaults>
</compile_context>

<pallas_src>
import functools
import math

import jax
import jax.numpy as jnp
from jax.experimental import pallas as pl
from jax.experimental.pallas import tpu as pltpu


def _layernorm_kernel(x_ref, scale_ref, shift_ref, o_ref, *, epsilon, inv_m):
    # x_ref: (tr, M) tile of rows; scale_ref / shift_ref: (1, M).
    x = x_ref[...].astype(jnp.float32)

    # One-pass statistics: the two row reductions are independent, so the XLU
    # chains can overlap.  f32 accumulation keeps the E[x^2]-mean^2 form's
    # cancellation error negligible for activation-scale data; clamp at 0 to
    # guard the sqrt.
    s1 = jnp.sum(x, axis=-1, keepdims=True)
    s2 = jnp.sum(x * x, axis=-1, keepdims=True)
    mean = s1 * inv_m
    var = jnp.maximum(s2 * inv_m - mean * mean, 0.0)
    std = jnp.sqrt(var)

    # PyTorch adds epsilon to the STANDARD DEVIATION.  Exact per-row divide:
    # only `tr` divides per tile (the broadcast multiply stays on the VPU), and
    # it keeps bitwise-close parity with the torch reference (the approximate
    # reciprocal caused the earlier tolerance failure).
    inv = 1.0 / (std + epsilon)

    scale = scale_ref[...].astype(jnp.float32)
    shift = shift_ref[...].astype(jnp.float32)
    y = scale * ((x - mean) * inv) + shift
    o_ref[...] = y.astype(o_ref.dtype)


def _round_up(v, m):
    return ((v + m - 1) // m) * m


def _vmem_limit_bytes():
    """Explicit scoped-VMEM limit, derived from the physical capacity:
    ~64 MiB on v5e/v6e (128 MiB physical), ~45 MiB on v7x (64 MiB physical)."""
    phys = 64 * 1024 * 1024  # conservative fallback (v7x-sized)
    try:
        info = pltpu.get_tpu_info()
        phys = int(getattr(info, "vmem_capacity_bytes", phys))
    except Exception:
        pass
    return int(min(64 * 1024 * 1024, int(phys * 0.70)))


def _choose_row_tile(n_rows, emb, itemsize, vmem_limit):
    """Pick a row tile.

    Budget = double-buffered input + output blocks in the native dtype plus
    ~3 f32-sized in-kernel temporaries (upcast x, centered x, y), kept within
    ~75% of the explicit vmem_limit so the compiler has headroom.  Rounded to
    the dtype's packed sublane tile and capped at ~8 MiB input blocks (beyond
    that the ~0.35us per-grid-step overhead is already <1% of the DMA time).
    """
    sublane = max(8, 32 // max(1, itemsize))   # 8 f32, 16 bf16, 32 int8/fp8
    io_row = max(1, emb * itemsize)
    f32_row = emb * 4
    per_row = 4 * io_row + 3 * f32_row
    budget = int(vmem_limit * 0.75)

    tr = max(sublane, budget // per_row)
    tr = min(tr, max(sublane, (8 * 1024 * 1024) // io_row))
    tr = max(sublane, (tr // sublane) * sublane)

    r_cap = _round_up(n_rows, sublane)
    tr = min(tr, r_cap)

    # Prefer >= 2 grid steps when there is enough work so the "parallel" row
    # axis can shard across both TensorCores on v7x (no-op on v5e/v6e).
    if r_cap > 2 * sublane and pl.cdiv(n_rows, tr) < 2:
        tr = max(sublane, _round_up(pl.cdiv(r_cap, 2), sublane))
    return tr


def layer_normalization(x, scale, shift, epsilon=1e-10):
    """LayerNormalization forward. x: (..., M), scale/shift: (M,)."""
    orig_shape = x.shape
    M = orig_shape[-1]
    R = int(math.prod(orig_shape[:-1])) if len(orig_shape) > 1 else 1
    x2 = x.reshape(R, M)
    scale2 = scale.reshape(1, M)
    shift2 = shift.reshape(1, M)

    vmem_limit = _vmem_limit_bytes()
    tr = _choose_row_tile(R, M, x2.dtype.itemsize, vmem_limit)
    grid = (pl.cdiv(R, tr),)

    # TODO(synk): for production shapes with M < 128, fold g = 128//M rows into
    # the lane dimension (segmented reduction) to present a lane-dense output
    # and avoid masked vst.msk partial stores.
    kernel = functools.partial(_layernorm_kernel, epsilon=epsilon, inv_m=1.0 / M)
    out = pl.pallas_call(
        kernel,
        out_shape=jax.ShapeDtypeStruct((R, M), x.dtype),
        grid_spec=pltpu.PrefetchScalarGridSpec(
            num_scalar_prefetch=0,
            grid=grid,
            in_specs=[
                pl.BlockSpec((tr, M), lambda i: (i, 0)),
                pl.BlockSpec((1, M), lambda i: (0, 0)),
                pl.BlockSpec((1, M), lambda i: (0, 0)),
            ],
            out_specs=pl.BlockSpec((tr, M), lambda i: (i, 0)),
        ),
        compiler_params=pltpu.CompilerParams(
            dimension_semantics=("parallel",),
            vmem_limit_bytes=vmem_limit,
        ),
    )(x2, scale2, shift2)
    return out.reshape(orig_shape)


def _reference(x, scale, shift, epsilon=1e-10):
    mean = jnp.mean(x, axis=-1, keepdims=True)
    std = jnp.sqrt(jnp.mean((x - mean) ** 2, axis=-1, keepdims=True))
    return scale * (x - mean) / (std + epsilon) + shift


if __name__ == "__main__":
    key = jax.random.PRNGKey(0)
    k1, k2, k3, k4 = jax.random.split(key, 4)

    # Shapes consistent with the module: (N, K, M) = (batch, seq, emb_dim).
    N, K, M = 2, 8, 32
    x = jax.random.normal(k1, (N, K, M), dtype=jnp.float32)

    # Deterministic parameter init mirroring the module's __init__:
    # scale = ones(emb_dim), shift = zeros(emb_dim)
    scale = jnp.ones((M,), dtype=jnp.float32)
    shift = jnp.zeros((M,), dtype=jnp.float32)

    y = layer_normalization(x, scale, shift, epsilon=1e-10)
    y = jax.block_until_ready(y)
    y_ref = _reference(x, scale, shift, epsilon=1e-10)
    assert y.shape == x.shape
    # Exact divide + f32 accumulation: only f32 rounding separates us from the
    # reference.
    assert jnp.allclose(y, y_ref, atol=1e-4, rtol=1e-4)

    # Second check: non-trivial scale/shift and a row count that is not a
    # multiple of the sublane tile (exercises the masked partial-block path).
    N2, K2 = 3, 5
    x2 = jax.random.normal(k2, (N2, K2, M), dtype=jnp.float32)
    scale2 = jax.random.normal(k3, (M,), dtype=jnp.float32)
    shift2 = jax.random.normal(k4, (M,), dtype=jnp.float32)
    y2 = jax.block_until_ready(layer_normalization(x2, scale2, shift2))
    y2_ref = _reference(x2, scale2, shift2)
    assert y2.shape == x2.shape
    assert jnp.allclose(y2, y2_ref, atol=1e-4, rtol=1e-4)

    print("KERNEL_OK")
</pallas_src>

<mosaic_0001>
module attributes {stable_mosaic.version = 11 : i64} {
  func.func @_layernorm_kernel(%arg0: i32, %arg1: memref<16x32xf32, #tpu.memory_space<vmem>>, %arg2: memref<1x32xf32, #tpu.memory_space<vmem>>, %arg3: memref<1x32xf32, #tpu.memory_space<vmem>>, %arg4: memref<16x32xf32, #tpu.memory_space<vmem>>) attributes {dimension_semantics = [#tpu.dimension_semantics<parallel>], iteration_bounds = array<i64: 1>, scalar_prefetch = 0 : i64, scratch_operands = 0 : i64, tpu.core_type = #tpu.core_type<tc>, window_params = [{transform_indices = @transform_0, window_bounds = array<i64: 16, 32>}, {pipeline_mode = #tpu.pipeline_mode<synchronous>, transform_indices = @transform_1, window_bounds = array<i64: 1, 32>}, {pipeline_mode = #tpu.pipeline_mode<synchronous>, transform_indices = @transform_2, window_bounds = array<i64: 1, 32>}, {transform_indices = @transform_3, window_bounds = array<i64: 16, 32>}]} {
    %c0 = arith.constant 0 : index
    %c0_0 = arith.constant 0 : index
    %0 = vector.load %arg1[%c0, %c0_0] : memref<16x32xf32, #tpu.memory_space<vmem>>, vector<16x32xf32>
    %cst = arith.constant dense<0.000000e+00> : vector<16xf32>
    %1 = vector.multi_reduction <add>, %0, %cst [1] : vector<16x32xf32> to vector<16xf32>
    %2 = vector.shape_cast %1 : vector<16xf32> to vector<16x1xf32>
    %3 = arith.mulf %0, %0 : vector<16x32xf32>
    %cst_1 = arith.constant dense<0.000000e+00> : vector<16xf32>
    %4 = vector.multi_reduction <add>, %3, %cst_1 [1] : vector<16x32xf32> to vector<16xf32>
    %5 = vector.shape_cast %4 : vector<16xf32> to vector<16x1xf32>
    %cst_2 = arith.constant 3.125000e-02 : f32
    %6 = vector.broadcast %cst_2 : f32 to vector<16x1xf32>
    %7 = arith.mulf %2, %6 : vector<16x1xf32>
    %cst_3 = arith.constant 3.125000e-02 : f32
    %8 = vector.broadcast %cst_3 : f32 to vector<16x1xf32>
    %9 = arith.mulf %5, %8 : vector<16x1xf32>
    %10 = arith.mulf %7, %7 : vector<16x1xf32>
    %11 = arith.subf %9, %10 : vector<16x1xf32>
    %cst_4 = arith.constant 0.000000e+00 : f32
    %12 = vector.broadcast %cst_4 : f32 to vector<16x1xf32>
    %13 = arith.maximumf %11, %12 : vector<16x1xf32>
    %14 = math.sqrt %13 : vector<16x1xf32>
    %cst_5 = arith.constant 1.000000e-10 : f32
    %15 = vector.broadcast %cst_5 : f32 to vector<16x1xf32>
    %16 = arith.addf %14, %15 : vector<16x1xf32>
    %cst_6 = arith.constant 1.000000e+00 : f32
    %17 = vector.broadcast %cst_6 : f32 to vector<16x1xf32>
    %18 = arith.divf %17, %16 : vector<16x1xf32>
    %c0_7 = arith.constant 0 : index
    %c0_8 = arith.constant 0 : index
    %19 = vector.load %arg2[%c0_7, %c0_8] : memref<1x32xf32, #tpu.memory_space<vmem>>, vector<1x32xf32>
    %c0_9 = arith.constant 0 : index
    %c0_10 = arith.constant 0 : index
    %20 = vector.load %arg3[%c0_9, %c0_10] : memref<1x32xf32, #tpu.memory_space<vmem>>, vector<1x32xf32>
    %21 = vector.broadcast %7 : vector<16x1xf32> to vector<16x32xf32>
    %22 = arith.subf %0, %21 : vector<16x32xf32>
    %23 = vector.broadcast %18 : vector<16x1xf32> to vector<16x32xf32>
    %24 = arith.mulf %22, %23 : vector<16x32xf32>
    %25 = vector.broadcast %19 : vector<1x32xf32> to vector<16x32xf32>
    %26 = arith.mulf %25, %24 : vector<16x32xf32>
    %27 = vector.broadcast %20 : vector<1x32xf32> to vector<16x32xf32>
    %28 = arith.addf %26, %27 : vector<16x32xf32>
    %c0_11 = arith.constant 0 : index
    %c0_12 = arith.constant 0 : index
    %29 = vector.load %arg4[%c0_11, %c0_12] : memref<16x32xf32, #tpu.memory_space<vmem>>, vector<16x32xf32>
    tpu.vector_store %arg4[%c0_11, %c0_12], %28 {strides = array<i32>} : memref<16x32xf32, #tpu.memory_space<vmem>>, vector<16x32xf32>,
    return
  }
  func.func @transform_0(%arg0: i32) -> (i32, i32) {
    %c0_i32 = arith.constant 0 : i32
    %c0_i32_0 = arith.constant 0 : i32
    return %arg0, %c0_i32 : i32, i32
  }
  func.func @transform_1(%arg0: i32) -> (i32, i32) {
    %c0_i32 = arith.constant 0 : i32
    %c0_i32_0 = arith.constant 0 : i32
    %c0_i32_1 = arith.constant 0 : i32
    return %c0_i32, %c0_i32_0 : i32, i32
  }
  func.func @transform_2(%arg0: i32) -> (i32, i32) {
    %c0_i32 = arith.constant 0 : i32
    %c0_i32_0 = arith.constant 0 : i32
    %c0_i32_1 = arith.constant 0 : i32
    return %c0_i32, %c0_i32_0 : i32, i32
  }
  func.func @transform_3(%arg0: i32) -> (i32, i32) {
    %c0_i32 = arith.constant 0 : i32
    %c0_i32_0 = arith.constant 0 : i32
    return %arg0, %c0_i32 : i32, i32
  }
}

</mosaic_0001>

<llo_original>
// kernel: tpu_custom_call.1
$region0: #{tpu_custom_call.1}
  #allocation0 [shape = 'u32[]', space=smem, size = 0x4, offset = 0x4, fixed_abs, tag = 'smem constant byte address 0x4 - core index']
  #allocation1 [shape = 'u32[144,128]{1,0:T(1,128)}', space=vmem, size = 0x12000, scoped, tag = 'internal scratch']
  %s0 = inlined_call_operand.hbm [shape: f32[16,32], index: 0, kind: input, shape index: {}]
  %s1 = inlined_call_operand.vmem [shape: f32[1,32], index: 1, kind: input, shape index: {}]
  %s2 = inlined_call_operand.vmem [shape: f32[1,32], index: 2, kind: input, shape index: {}]
  %s3 = inlined_call_operand.hbm [shape: f32[16,32], index: 3, kind: output, shape index: {}]
  %s4 = sld [smem:[#allocation0]]
  $region26: #{tpu_custom_call.1} parent=0
    _
  %s6 = ssub.s32 1, %s4
  %s7 = scalar_select 0, %s6, %s4
  $region1: #{tpu_custom_call.1} parent=0
    #allocation2 [shape = 'u8[8192]{0}', space=vmem, size = 0x2000, scoped, tag = 'input window, operand 0, single buffered']
    #allocation3 [shape = 's32[1]{0}', space=sflag, size = 0x4, scoped, tag = 'scoped memory for tpu_custom_call.1']
    #allocation4 [shape = 's32[1]{0}', space=sflag, size = 0x4, scoped, tag = 'scoped memory for tpu_custom_call.1']
    #allocation5 [shape = 'u8[8192]{0}', space=vmem, size = 0x2000, scoped, tag = 'output window, operand 0, single buffered']
    %8 = vsyncpa [#allocation3], 0
    %9 = vsyncpa [#allocation4], 0
    // Predicated region
    $region2: #{tpu_custom_call.1} parent=1 // pred_check
      _
    $region3: #{tpu_custom_call.1} parent=1 // pred_check_branch
      %11 = sbr.rel (0) target = $region5
    $region4: #{tpu_custom_call.1} parent=1 // pred_region
      %s13 = ssub.s32 256, 256
      %14 = vsyncadd [#allocation3], %s13
      %s15 = sshll.u32 [#allocation2], 4
      %s16 = int_to_ptr.vmem [resolvable:$true] %s15
      %21 = dma.hbm_to_vmem [thread:$0]  %s0, 256, %s16, [#allocation3], 128, 128, 8
    $region5: #{tpu_custom_call.1} parent=1 // pred_fallthru
      _
    // Predicated region
    $region6: #{tpu_custom_call.1} parent=1 // pred_check
      _
    $region7: #{tpu_custom_call.1} parent=1 // pred_check_branch
      %23 = sbr.rel (0) target = $region9
    $region8: #{tpu_custom_call.1} parent=1 // pred_region
      _
    $region9: #{tpu_custom_call.1} parent=1 // pred_fallthru
      _
    // Predicated region
    $region10: #{tpu_custom_call.1} parent=1 // pred_check
      _
    $region11: #{tpu_custom_call.1} parent=1 // pred_check_branch
      %25 = sbr.rel (0) target = $region13
    $region12: #{tpu_custom_call.1} parent=1 // pred_region
      _
    $region13: #{tpu_custom_call.1} parent=1 // pred_fallthru
      _
    // Predicated region
    $region14: #{tpu_custom_call.1} parent=1 // pred_check
      _
    $region15: #{tpu_custom_call.1} parent=1 // pred_check_branch
      %27 = sbr.rel (0) target = $region17
    $region16: #{tpu_custom_call.1} parent=1 // pred_region
      %28 = dma.done [#allocation3], 256
    $region17: #{tpu_custom_call.1} parent=1 // pred_fallthru
      _
    %v29 = vld [vmem:[#allocation2] sm:$0xff]
    %v30 = vld [vmem:[#allocation2 + $0x8] sm:$0xff]
    %vm31 = vcmask 261120
    %v32 = vsel %vm31, %v29, 0.0
    %33 = vadd.xlane.f32.xlu0 %v32
    %v34 = vpop.xlane.xlu0 %33
    %v35 = vsel %vm31, %v30, 0.0
    %36 = vadd.xlane.f32.xlu0 %v35
    %v37 = vpop.xlane.xlu0 %36
    %v38 = vmul.f32 %v29, %v29
    %v39 = vmul.f32 %v30, %v30
    %v40 = vsel %vm31, %v38, 0.0
    %41 = vadd.xlane.f32.xlu0 %v40
    %v42 = vpop.xlane.xlu0 %41
    %v43 = vsel %vm31, %v39, 0.0
    %44 = vadd.xlane.f32.xlu0 %v43
    %v45 = vpop.xlane.xlu0 %44
    %v46 = vmul.f32 %v34, 0.03125
    %v47 = vmul.f32 %v37, 0.03125
    %v48 = vmul.f32 %v42, 0.03125
    %v49 = vmul.f32 %v45, 0.03125
    %v50 = vmul.f32 %v46, %v46
    %v51 = vmul.f32 %v47, %v47
    %v52 = vsub.f32 %v48, %v50
    %v53 = vsub.f32 %v49, %v51
    %v54 = vmax.f32 %v52, 0.0
    %v55 = vmax.f32 %v53, 0.0
    %v56 = vrsqrt.pop %v54
    %v57 = vmul.f32 %v54, %v56
    %vm58 = vcmp.eq.f32.partialorder %v54, inf
    %v59 = vsel %vm58, %v54, %v57
    %vm60 = vcmp.eq.f32.partialorder %v54, 0.0
    %v61 = vand.u32 %v54, 2147483648
    %v62 = vsel %vm60, %v61, %v59
    %v63 = vrsqrt.pop %v55
    %v64 = vmul.f32 %v55, %v63
    %vm65 = vcmp.eq.f32.partialorder %v55, inf
    %v66 = vsel %vm65, %v55, %v64
    %vm67 = vcmp.eq.f32.partialorder %v55, 0.0
    %v68 = vand.u32 %v55, 2147483648
    %v69 = vsel %vm67, %v68, %v66
    %v70 = vadd.f32 %v62, 1e-10
    %v71 = vadd.f32 %v69, 1e-10
    %v72 = vrcp.pop %v70
    %v73 = vmul.f32 1.0, %v72
    %v74 = vrcp.pop %v71
    %v75 = vmul.f32 1.0, %v74
    %v76 = vld [vmem:[%s1] sm:$0x1]
    %v77 = vld [vmem:[%s2] sm:$0x1]
    %v78 = vsub.f32 %v29, %v46
    %v79 = vsub.f32 %v30, %v47
    %v80 = vmul.f32 %v78, %v73
    %v81 = vmul.f32 %v79, %v75
    %v83 = vlaneseq
    %v84 = vshrl.u32 %v83, 7
    %v85 = vsub.s32 0, %v84
    %v86 = vrot.slane %v76, %v85
    %v88 = vmul.f32 %v86, %v80
    %v89 = vmul.f32 %v86, %v81
    %v91 = vlaneseq
    %v92 = vshrl.u32 %v91, 7
    %v93 = vsub.s32 0, %v92
    %v94 = vrot.slane %v77, %v93
    %v96 = vadd.f32 %v88, %v94
    %v97 = vadd.f32 %v89, %v94
    %98 = vst.msk [vmem:[#allocation5] sm:$0xff] %vm31, %v96
    %99 = vst.msk [vmem:[#allocation5 + $0x8] sm:$0xff] %vm31, %v97
    // Predicated region
    $region18: #{tpu_custom_call.1} parent=1 // pred_check
      _
    $region19: #{tpu_custom_call.1} parent=1 // pred_check_branch
      %101 = sbr.rel (0) target = $region21
    $region20: #{tpu_custom_call.1} parent=1 // pred_region
      %s103 = ssub.s32 256, 256
      %104 = vsyncadd [#allocation4], %s103
      %s105 = sshll.u32 [#allocation5], 4
      %s106 = int_to_ptr.vmem [resolvable:$true] %s105
      %111 = dma.vmem_to_hbm [thread:$0]  %s106, 256, %s3, [#allocation4], 128, 128, 8
    $region21: #{tpu_custom_call.1} parent=1 // pred_fallthru
      _
    // Predicated region
    $region22: #{tpu_custom_call.1} parent=1 // pred_check
      _
    $region23: #{tpu_custom_call.1} parent=1 // pred_check_branch
      %113 = sbr.rel (0) target = $region25
    $region24: #{tpu_custom_call.1} parent=1 // pred_region
      %114 = dma.done [#allocation4], 256
    $region25: #{tpu_custom_call.1} parent=1 // pred_fallthru
      _
    %115 = vsyncpa [#allocation3], 1
    %116 = vsyncpa [#allocation4], 1

</llo_original>
